<compile_context>
chip_gen: v7x
topology: tpu7x:2x2x1
jax: 0.10.0
libtpu: 0.0.40
codegen_flags: <defaults>
</compile_context>

<pallas_src>
import jax
import jax.numpy as jnp
from jax.experimental import pallas as pl
from jax.experimental.pallas import tpu as pltpu

_OUT_PAD = 128  # lane-dense width for the (.., 2) cross-projection output


def _make_kernel(compute_dtype, approx_recip):
    def kernel(txt_ref, img_ref, wq_ref, bq_ref, wk_ref, bk_ref,
               wvc_ref, bvc_ref, bc_ref, scores_ref, out_ref):
        txt = txt_ref[...]        # (Tq, D)       compute_dtype
        img = img_ref[...]        # (S_img, D)    compute_dtype

        # Projections: MXU matmuls with f32 accumulation, f32 biases.
        q = jnp.dot(txt, wq_ref[...], preferred_element_type=jnp.float32) + bq_ref[...]
        k = jnp.dot(img, wk_ref[...], preferred_element_type=jnp.float32) + bk_ref[...]
        # Folded V*cross projection: (S_img, _OUT_PAD); only [:, :2] is meaningful.
        vc = jnp.dot(img, wvc_ref[...], preferred_element_type=jnp.float32) + bvc_ref[...]

        # q @ k^T without materializing a transpose: contract the shared
        # feature (last) axis of both operands directly on the MXU.
        s = jax.lax.dot_general(
            q.astype(compute_dtype), k.astype(compute_dtype),
            dimension_numbers=(((1,), (1,)), ((), ())),
            preferred_element_type=jnp.float32)            # (Tq, S_img)

        # Numerically-stable softmax over the image axis.
        s = s - jnp.max(s, axis=-1, keepdims=True)
        e = jnp.exp(s)
        p = e * pl.reciprocal(jnp.sum(e, axis=-1, keepdims=True), approx=approx_recip)

        scores_ref[...] = p.astype(scores_ref.dtype)

        # attn_output (lane-padded): p @ vc + bc
        out = jnp.dot(p.astype(compute_dtype), vc.astype(compute_dtype),
                      preferred_element_type=jnp.float32) + bc_ref[...]
        out_ref[...] = out.astype(out_ref.dtype)

    return kernel


def cross_attention(txt_feat, img_feat, params, *, tq=256, precise=False):
    """txt_feat: (B, S_txt, D), img_feat: (B, S_img, D). Returns (scores, output)."""
    B, S_txt, D = txt_feat.shape
    Bi, S_img, Di = img_feat.shape
    assert (B, D) == (Bi, Di)

    compute_dtype = jnp.float32 if precise else jnp.bfloat16

    wq, bq = params["wq"], params["bq"]   # (D, D), (1, D)
    wk, bk = params["wk"], params["bk"]
    wv, bv = params["wv"], params["bv"]
    wc, bc = params["wc"], params["bc"]   # (D, 2), (1, 2)
    n_out = wc.shape[1]

    # Fold the `cross` Linear into the V path (once, in f32, outside the kernel).
    w_vc = jnp.dot(wv, wc, preferred_element_type=jnp.float32)   # (D, 2)
    b_vc = jnp.dot(bv, wc, preferred_element_type=jnp.float32)   # (1, 2)

    # Pad the narrow output path to a lane-dense 128 columns (unmasked vst).
    w_vc_p = jnp.zeros((D, _OUT_PAD), jnp.float32).at[:, :n_out].set(w_vc)
    b_vc_p = jnp.zeros((1, _OUT_PAD), jnp.float32).at[:, :n_out].set(b_vc)
    bc_p = jnp.zeros((1, _OUT_PAD), jnp.float32).at[:, :n_out].set(bc)

    # bf16 MXU operands (activations + weights); biases stay f32 (f32 accumulators).
    txt_c = txt_feat.astype(compute_dtype)
    img_c = img_feat.astype(compute_dtype)
    wq_c = wq.astype(compute_dtype)
    wk_c = wk.astype(compute_dtype)
    wvc_c = w_vc_p.astype(compute_dtype)

    # Tile S_txt (second, parallel grid axis). Keeps VMEM bounded for long
    # sequences and gives both v7x TensorCores work even when B is small.
    tq_ = min(tq, S_txt)
    if tq_ < S_txt:
        tq_ = max(16, (tq_ // 16) * 16)      # sublane-safe for bf16 and f32
        if S_txt % tq_ != 0:
            tq_ = S_txt                       # fall back to one full-S_txt block
    nq = S_txt // tq_

    rep = lambda b, qi: (0, 0)   # weights / biases: same block for every grid point

    grid_spec = pltpu.PrefetchScalarGridSpec(
        num_scalar_prefetch=0,
        grid=(B, nq),
        in_specs=[
            pl.BlockSpec((pl.Squeezed(), tq_, D), lambda b, qi: (b, qi, 0)),     # txt
            pl.BlockSpec((pl.Squeezed(), S_img, D), lambda b, qi: (b, 0, 0)),    # img
            pl.BlockSpec((D, D), rep), pl.BlockSpec((1, D), rep),                # wq, bq
            pl.BlockSpec((D, D), rep), pl.BlockSpec((1, D), rep),                # wk, bk
            pl.BlockSpec((D, _OUT_PAD), rep),                                    # w_vc (folded)
            pl.BlockSpec((1, _OUT_PAD), rep),                                    # b_vc (folded)
            pl.BlockSpec((1, _OUT_PAD), rep),                                    # bc
        ],
        out_specs=[
            pl.BlockSpec((pl.Squeezed(), tq_, S_img), lambda b, qi: (b, qi, 0)),
            pl.BlockSpec((pl.Squeezed(), tq_, _OUT_PAD), lambda b, qi: (b, qi, 0)),
        ],
    )

    itemsize_c = jnp.dtype(compute_dtype).itemsize
    flops = 2 * B * (S_txt * D * D                 # Q projection
                     + nq * S_img * D * D          # K projection (per q-tile)
                     + nq * S_img * D * _OUT_PAD   # folded V*cross projection
                     + S_txt * S_img * D           # QK^T
                     + S_txt * S_img * _OUT_PAD)   # P @ VC
    bytes_accessed = ((B * S_txt * D + B * S_img * D) * itemsize_c        # activations
                      + (2 * D * D + D * _OUT_PAD) * itemsize_c           # weights
                      + (2 * D + 2 * _OUT_PAD) * 4                        # biases
                      + (B * S_txt * S_img + B * S_txt * _OUT_PAD) * 4)   # outputs
    cost = pl.CostEstimate(flops=int(flops),
                           transcendentals=int(B * S_txt * S_img),
                           bytes_accessed=int(bytes_accessed))

    kernel = _make_kernel(compute_dtype, approx_recip=not precise)

    scores, out_p = pl.pallas_call(
        kernel,
        out_shape=(
            jax.ShapeDtypeStruct((B, S_txt, S_img), jnp.float32),
            jax.ShapeDtypeStruct((B, S_txt, _OUT_PAD), jnp.float32),
        ),
        grid_spec=grid_spec,
        cost_estimate=cost,
        compiler_params=pltpu.CompilerParams(
            dimension_semantics=("parallel", "parallel"),
            vmem_limit_bytes=64 * 1024 * 1024),
    )(txt_c, img_c, wq_c, bq, wk_c, bk, wvc_c, b_vc_p, bc_p)

    return scores, out_p[:, :, :n_out]


def init_params(key, feature_dim):
    """Deterministic init mimicking PyTorch nn.Linear (uniform +-1/sqrt(fan_in)).

    Weights are stored already transposed to (in, out).
    """
    ks = jax.random.split(key, 8)
    bound = 1.0 / jnp.sqrt(feature_dim)
    u = lambda k, shape: jax.random.uniform(k, shape, jnp.float32, -bound, bound)
    return {
        "wq": u(ks[0], (feature_dim, feature_dim)), "bq": u(ks[1], (1, feature_dim)),
        "wk": u(ks[2], (feature_dim, feature_dim)), "bk": u(ks[3], (1, feature_dim)),
        "wv": u(ks[4], (feature_dim, feature_dim)), "bv": u(ks[5], (1, feature_dim)),
        "wc": u(ks[6], (feature_dim, 2)),           "bc": u(ks[7], (1, 2)),
    }


def _reference(txt, img, p):
    q = txt @ p["wq"] + p["bq"]
    k = img @ p["wk"] + p["bk"]
    v = img @ p["wv"] + p["bv"]
    s = jnp.einsum("btd,bsd->bts", q, k)
    s = jax.nn.softmax(s, axis=-1)
    o = jnp.einsum("bts,bsd->btd", s, v) @ p["wc"] + p["bc"]
    return s, o


if __name__ == "__main__":
    B, S_TXT, S_IMG, D = 2, 8, 8, 32

    key = jax.random.PRNGKey(0)
    k_txt, k_img, k_par = jax.random.split(key, 3)
    txt_feat = jax.random.normal(k_txt, (B, S_TXT, D), jnp.float32)
    img_feat = jax.random.normal(k_img, (B, S_IMG, D), jnp.float32)
    params = init_params(k_par, D)

    ref_scores, ref_output = _reference(txt_feat, img_feat, params)

    # Fast path: bf16 MXU operands + EUP approximate softmax reciprocal.
    scores, output = cross_attention(txt_feat, img_feat, params, precise=False)
    jax.block_until_ready((scores, output))
    assert scores.shape == (B, S_TXT, S_IMG) and output.shape == (B, S_TXT, 2)
    assert jnp.allclose(scores, ref_scores, atol=3e-2, rtol=5e-2)
    assert jnp.allclose(output, ref_output, atol=3e-2, rtol=5e-2)

    # Precise path: f32 MXU operands + exact reciprocal; matches reference tightly.
    scores_p, output_p = cross_attention(txt_feat, img_feat, params, precise=True)
    jax.block_until_ready((scores_p, output_p))
    assert jnp.allclose(scores_p, ref_scores, atol=1e-4, rtol=1e-4)
    assert jnp.allclose(output_p, ref_output, atol=1e-4, rtol=1e-4)

    print("KERNEL_OK")
</pallas_src>

<mosaic_0001>
module attributes {stable_mosaic.version = 11 : i64} {
  func.func @kernel(%arg0: i32, %arg1: i32, %arg2: memref<1x8x32xbf16, #tpu.memory_space<vmem>>, %arg3: memref<1x8x32xbf16, #tpu.memory_space<vmem>>, %arg4: memref<32x32xbf16, #tpu.memory_space<vmem>>, %arg5: memref<1x32xf32, #tpu.memory_space<vmem>>, %arg6: memref<32x32xbf16, #tpu.memory_space<vmem>>, %arg7: memref<1x32xf32, #tpu.memory_space<vmem>>, %arg8: memref<32x128xbf16, #tpu.memory_space<vmem>>, %arg9: memref<1x128xf32, #tpu.memory_space<vmem>>, %arg10: memref<1x128xf32, #tpu.memory_space<vmem>>, %arg11: memref<1x8x8xf32, #tpu.memory_space<vmem>>, %arg12: memref<1x8x128xf32, #tpu.memory_space<vmem>>) attributes {dimension_semantics = [#tpu.dimension_semantics<parallel>, #tpu.dimension_semantics<parallel>], iteration_bounds = array<i64: 2, 1>, scalar_prefetch = 0 : i64, scratch_operands = 0 : i64, tpu.core_type = #tpu.core_type<tc>, window_params = [{transform_indices = @transform_0, window_bounds = array<i64: 1, 8, 32>}, {transform_indices = @transform_1, window_bounds = array<i64: 1, 8, 32>}, {pipeline_mode = #tpu.pipeline_mode<synchronous>, transform_indices = @transform_2, window_bounds = array<i64: 32, 32>}, {pipeline_mode = #tpu.pipeline_mode<synchronous>, transform_indices = @transform_3, window_bounds = array<i64: 1, 32>}, {pipeline_mode = #tpu.pipeline_mode<synchronous>, transform_indices = @transform_4, window_bounds = array<i64: 32, 32>}, {pipeline_mode = #tpu.pipeline_mode<synchronous>, transform_indices = @transform_5, window_bounds = array<i64: 1, 32>}, {pipeline_mode = #tpu.pipeline_mode<synchronous>, transform_indices = @transform_6, window_bounds = array<i64: 32, 128>}, {pipeline_mode = #tpu.pipeline_mode<synchronous>, transform_indices = @transform_7, window_bounds = array<i64: 1, 128>}, {pipeline_mode = #tpu.pipeline_mode<synchronous>, transform_indices = @transform_8, window_bounds = array<i64: 1, 128>}, {transform_indices = @transform_9, window_bounds = array<i64: 1, 8, 8>}, {transform_indices = @transform_10, window_bounds = array<i64: 1, 8, 128>}]} {
    %c0 = arith.constant 0 : index
    %c0_0 = arith.constant 0 : index
    %c0_1 = arith.constant 0 : index
    %0 = vector.load %arg2[%c0, %c0_0, %c0_1] : memref<1x8x32xbf16, #tpu.memory_space<vmem>>, vector<1x8x32xbf16>
    %1 = vector.shape_cast %0 : vector<1x8x32xbf16> to vector<8x32xbf16>
    %c0_2 = arith.constant 0 : index
    %c0_3 = arith.constant 0 : index
    %c0_4 = arith.constant 0 : index
    %2 = vector.load %arg3[%c0_2, %c0_3, %c0_4] : memref<1x8x32xbf16, #tpu.memory_space<vmem>>, vector<1x8x32xbf16>
    %3 = vector.shape_cast %2 : vector<1x8x32xbf16> to vector<8x32xbf16>
    %c0_5 = arith.constant 0 : index
    %c0_6 = arith.constant 0 : index
    %4 = vector.load %arg4[%c0_5, %c0_6] : memref<32x32xbf16, #tpu.memory_space<vmem>>, vector<32x32xbf16>
    %cst = arith.constant dense<0.000000e+00> : vector<8x32xf32>
    %5 = tpu.matmul %1, %4, %cst {dimension_numbers = #tpu.dot_dimension_numbers<[1], [0], [0], [1], [0, 0, 1, 1], [], []>} : vector<8x32xbf16>, vector<32x32xbf16>, vector<8x32xf32> -> vector<8x32xf32>
    %c0_7 = arith.constant 0 : index
    %c0_8 = arith.constant 0 : index
    %6 = vector.load %arg5[%c0_7, %c0_8] : memref<1x32xf32, #tpu.memory_space<vmem>>, vector<1x32xf32>
    %7 = vector.broadcast %6 : vector<1x32xf32> to vector<8x32xf32>
    %8 = arith.addf %5, %7 : vector<8x32xf32>
    %c0_9 = arith.constant 0 : index
    %c0_10 = arith.constant 0 : index
    %9 = vector.load %arg6[%c0_9, %c0_10] : memref<32x32xbf16, #tpu.memory_space<vmem>>, vector<32x32xbf16>
    %cst_11 = arith.constant dense<0.000000e+00> : vector<8x32xf32>
    %10 = tpu.matmul %3, %9, %cst_11 {dimension_numbers = #tpu.dot_dimension_numbers<[1], [0], [0], [1], [0, 0, 1, 1], [], []>} : vector<8x32xbf16>, vector<32x32xbf16>, vector<8x32xf32> -> vector<8x32xf32>
    %c0_12 = arith.constant 0 : index
    %c0_13 = arith.constant 0 : index
    %11 = vector.load %arg7[%c0_12, %c0_13] : memref<1x32xf32, #tpu.memory_space<vmem>>, vector<1x32xf32>
    %12 = vector.broadcast %11 : vector<1x32xf32> to vector<8x32xf32>
    %13 = arith.addf %10, %12 : vector<8x32xf32>
    %c0_14 = arith.constant 0 : index
    %c0_15 = arith.constant 0 : index
    %14 = vector.load %arg8[%c0_14, %c0_15] : memref<32x128xbf16, #tpu.memory_space<vmem>>, vector<32x128xbf16>
    %cst_16 = arith.constant dense<0.000000e+00> : vector<8x128xf32>
    %15 = tpu.matmul %3, %14, %cst_16 {dimension_numbers = #tpu.dot_dimension_numbers<[1], [0], [0], [1], [0, 0, 1, 1], [], []>} : vector<8x32xbf16>, vector<32x128xbf16>, vector<8x128xf32> -> vector<8x128xf32>
    %c0_17 = arith.constant 0 : index
    %c0_18 = arith.constant 0 : index
    %16 = vector.load %arg9[%c0_17, %c0_18] : memref<1x128xf32, #tpu.memory_space<vmem>>, vector<1x128xf32>
    %17 = vector.broadcast %16 : vector<1x128xf32> to vector<8x128xf32>
    %18 = arith.addf %15, %17 : vector<8x128xf32>
    %19 = arith.truncf %8 : vector<8x32xf32> to vector<8x32xbf16>
    %20 = arith.truncf %13 : vector<8x32xf32> to vector<8x32xbf16>
    %cst_19 = arith.constant dense<0.000000e+00> : vector<8x8xf32>
    %21 = tpu.matmul %19, %20, %cst_19 {dimension_numbers = #tpu.dot_dimension_numbers<[1], [1], [0], [0], [0, 0, 1, 0], [], []>} : vector<8x32xbf16>, vector<8x32xbf16>, vector<8x8xf32> -> vector<8x8xf32>
    %cst_20 = arith.constant dense<0xFF800000> : vector<8xf32>
    %22 = vector.multi_reduction <maximumf>, %21, %cst_20 [1] : vector<8x8xf32> to vector<8xf32>
    %23 = vector.shape_cast %22 : vector<8xf32> to vector<8x1xf32>
    %24 = vector.broadcast %23 : vector<8x1xf32> to vector<8x8xf32>
    %25 = arith.subf %21, %24 : vector<8x8xf32>
    %26 = math.exp %25 : vector<8x8xf32>
    %cst_21 = arith.constant dense<0.000000e+00> : vector<8xf32>
    %27 = vector.multi_reduction <add>, %26, %cst_21 [1] : vector<8x8xf32> to vector<8xf32>
    %28 = vector.shape_cast %27 : vector<8xf32> to vector<8x1xf32>
    %29 = tpu.reciprocal %28 {approx = true} : vector<8x1xf32> -> vector<8x1xf32>
    %30 = vector.broadcast %29 : vector<8x1xf32> to vector<8x8xf32>
    %31 = arith.mulf %26, %30 : vector<8x8xf32>
    %c0_22 = arith.constant 0 : index
    %c0_23 = arith.constant 0 : index
    %c0_24 = arith.constant 0 : index
    %32 = vector.load %arg11[%c0_22, %c0_23, %c0_24] : memref<1x8x8xf32, #tpu.memory_space<vmem>>, vector<1x8x8xf32>
    %33 = vector.shape_cast %32 : vector<1x8x8xf32> to vector<8x8xf32>
    %34 = vector.shape_cast %31 : vector<8x8xf32> to vector<1x8x8xf32>
    tpu.vector_store %arg11[%c0_22, %c0_23, %c0_24], %34 {strides = array<i32>} : memref<1x8x8xf32, #tpu.memory_space<vmem>>, vector<1x8x8xf32>,
    %35 = arith.truncf %31 : vector<8x8xf32> to vector<8x8xbf16>
    %36 = arith.truncf %18 : vector<8x128xf32> to vector<8x128xbf16>
    %cst_25 = arith.constant dense<0.000000e+00> : vector<8x128xf32>
    %37 = tpu.matmul %35, %36, %cst_25 {dimension_numbers = #tpu.dot_dimension_numbers<[1], [0], [0], [1], [0, 0, 1, 1], [], []>} : vector<8x8xbf16>, vector<8x128xbf16>, vector<8x128xf32> -> vector<8x128xf32>
    %c0_26 = arith.constant 0 : index
    %c0_27 = arith.constant 0 : index
    %38 = vector.load %arg10[%c0_26, %c0_27] : memref<1x128xf32, #tpu.memory_space<vmem>>, vector<1x128xf32>
    %39 = vector.broadcast %38 : vector<1x128xf32> to vector<8x128xf32>
    %40 = arith.addf %37, %39 : vector<8x128xf32>
    %c0_28 = arith.constant 0 : index
    %c0_29 = arith.constant 0 : index
    %c0_30 = arith.constant 0 : index
    %41 = vector.load %arg12[%c0_28, %c0_29, %c0_30] : memref<1x8x128xf32, #tpu.memory_space<vmem>>, vector<1x8x128xf32>
    %42 = vector.shape_cast %41 : vector<1x8x128xf32> to vector<8x128xf32>
    %43 = vector.shape_cast %40 : vector<8x128xf32> to vector<1x8x128xf32>
    tpu.vector_store %arg12[%c0_28, %c0_29, %c0_30], %43 {strides = array<i32>} : memref<1x8x128xf32, #tpu.memory_space<vmem>>, vector<1x8x128xf32>,
    return
  }
  func.func @transform_0(%arg0: i32, %arg1: i32) -> (i32, i32, i32) {
    %c0_i32 = arith.constant 0 : i32
    %c0_i32_0 = arith.constant 0 : i32
    return %arg0, %arg1, %c0_i32 : i32, i32, i32
  }
  func.func @transform_1(%arg0: i32, %arg1: i32) -> (i32, i32, i32) {
    %c0_i32 = arith.constant 0 : i32
    %c0_i32_0 = arith.constant 0 : i32
    %c0_i32_1 = arith.constant 0 : i32
    return %arg0, %c0_i32, %c0_i32_0 : i32, i32, i32
  }
  func.func @transform_2(%arg0: i32, %arg1: i32) -> (i32, i32) {
    %c0_i32 = arith.constant 0 : i32
    %c0_i32_0 = arith.constant 0 : i32
    %c0_i32_1 = arith.constant 0 : i32
    return %c0_i32, %c0_i32_0 : i32, i32
  }
  func.func @transform_3(%arg0: i32, %arg1: i32) -> (i32, i32) {
    %c0_i32 = arith.constant 0 : i32
    %c0_i32_0 = arith.constant 0 : i32
    %c0_i32_1 = arith.constant 0 : i32
    return %c0_i32, %c0_i32_0 : i32, i32
  }
  func.func @transform_4(%arg0: i32, %arg1: i32) -> (i32, i32) {
    %c0_i32 = arith.constant 0 : i32
    %c0_i32_0 = arith.constant 0 : i32
    %c0_i32_1 = arith.constant 0 : i32
    return %c0_i32, %c0_i32_0 : i32, i32
  }
  func.func @transform_5(%arg0: i32, %arg1: i32) -> (i32, i32) {
    %c0_i32 = arith.constant 0 : i32
    %c0_i32_0 = arith.constant 0 : i32
    %c0_i32_1 = arith.constant 0 : i32
    return %c0_i32, %c0_i32_0 : i32, i32
  }
  func.func @transform_6(%arg0: i32, %arg1: i32) -> (i32, i32) {
    %c0_i32 = arith.constant 0 : i32
    %c0_i32_0 = arith.constant 0 : i32
    %c0_i32_1 = arith.constant 0 : i32
    return %c0_i32, %c0_i32_0 : i32, i32
  }
  func.func @transform_7(%arg0: i32, %arg1: i32) -> (i32, i32) {
    %c0_i32 = arith.constant 0 : i32
    %c0_i32_0 = arith.constant 0 : i32
    %c0_i32_1 = arith.constant 0 : i32
    return %c0_i32, %c0_i32_0 : i32, i32
  }
  func.func @transform_8(%arg0: i32, %arg1: i32) -> (i32, i32) {
    %c0_i32 = arith.constant 0 : i32
    %c0_i32_0 = arith.constant 0 : i32
    %c0_i32_1 = arith.constant 0 : i32
    return %c0_i32, %c0_i32_0 : i32, i32
  }
  func.func @transform_9(%arg0: i32, %arg1: i32) -> (i32, i32, i32) {
    %c0_i32 = arith.constant 0 : i32
    %c0_i32_0 = arith.constant 0 : i32
    return %arg0, %arg1, %c0_i32 : i32, i32, i32
  }
  func.func @transform_10(%arg0: i32, %arg1: i32) -> (i32, i32, i32) {
    %c0_i32 = arith.constant 0 : i32
    %c0_i32_0 = arith.constant 0 : i32
    return %arg0, %arg1, %c0_i32 : i32, i32, i32
  }
}

</mosaic_0001>

<llo_original>
// kernel: tpu_custom_call.1
$region0: #{tpu_custom_call.1}
  #allocation0 [shape = 'u32[]', space=smem, size = 0x4, offset = 0x4, fixed_abs, tag = 'smem constant byte address 0x4 - core index']
  #allocation1 [shape = 'u32[144,128]{1,0:T(1,128)}', space=vmem, size = 0x12000, scoped, tag = 'internal scratch']
  %s0 = inlined_call_operand.hbm [shape: bf16[2,8,32], index: 0, kind: input, shape index: {}]
  %s1 = inlined_call_operand.hbm [shape: bf16[2,8,32], index: 1, kind: input, shape index: {}]
  %s2 = inlined_call_operand.hbm [shape: bf16[32,32], index: 2, kind: input, shape index: {}]
  %s3 = inlined_call_operand.hbm [shape: f32[1,32], index: 3, kind: input, shape index: {}]
  %s4 = inlined_call_operand.hbm [shape: bf16[32,32], index: 4, kind: input, shape index: {}]
  %s5 = inlined_call_operand.hbm [shape: f32[1,32], index: 5, kind: input, shape index: {}]
  %s6 = inlined_call_operand.hbm [shape: bf16[32,128], index: 6, kind: input, shape index: {}]
  %s7 = inlined_call_operand.hbm [shape: f32[1,128], index: 7, kind: input, shape index: {}]
  %s8 = inlined_call_operand.hbm [shape: f32[1,128], index: 8, kind: input, shape index: {}]
  %s9 = inlined_call_operand.hbm [shape: f32[2,8,8], index: 9, kind: output, shape index: {0}]
  %s10 = inlined_call_operand.hbm [shape: f32[2,8,128], index: 10, kind: output, shape index: {1}]
  %11 = xla_tuple %s9, %s10
  %s12 = sld [smem:[#allocation0]]
  $region113: #{tpu_custom_call.1} parent=0
    _
  %s14 = ssub.s32 1, %s12
  %s15 = scalar_select 0, %s14, %s12
  $region1: #{tpu_custom_call.1} parent=0
    #allocation2 [shape = 'u8[4096]{0}', space=vmem, size = 0x1000, scoped, tag = 'input window, operand 0']
    #allocation3 [shape = 's32[2]{0}', space=sflag, size = 0x8, scoped, tag = 'scoped memory for tpu_custom_call.1']
    #allocation4 [shape = 's32[2]{0}', space=sflag, size = 0x8, scoped, tag = 'scoped memory for tpu_custom_call.1']
    #allocation5 [shape = 'u8[4096]{0}', space=vmem, size = 0x1000, scoped, tag = 'input window, operand 1']
    #allocation6 [shape = 's32[2]{0}', space=sflag, size = 0x8, scoped, tag = 'scoped memory for tpu_custom_call.1']
    #allocation7 [shape = 'u8[8192]{0}', space=vmem, size = 0x2000, scoped, tag = 'input window, operand 2, single buffered']
    #allocation8 [shape = 'u8[512]{0}', space=vmem, size = 0x400, scoped, tag = 'input window, operand 3, single buffered']
    #allocation9 [shape = 's32[1]{0}', space=sflag, size = 0x4, scoped, tag = 'scoped memory for tpu_custom_call.1']
    #allocation10 [shape = 'u8[8192]{0}', space=vmem, size = 0x2000, scoped, tag = 'input window, operand 4, single buffered']
    #allocation11 [shape = 'u8[512]{0}', space=vmem, size = 0x400, scoped, tag = 'input window, operand 5, single buffered']
    #allocation12 [shape = 's32[1]{0}', space=sflag, size = 0x4, scoped, tag = 'scoped memory for tpu_custom_call.1']
    #allocation13 [shape = 'u8[8192]{0}', space=vmem, size = 0x2000, scoped, tag = 'input window, operand 6, single buffered']
    #allocation14 [shape = 'u8[512]{0}', space=vmem, size = 0x400, scoped, tag = 'input window, operand 7, single buffered']
    #allocation15 [shape = 's32[1]{0}', space=sflag, size = 0x4, scoped, tag = 'scoped memory for tpu_custom_call.1']
    #allocation16 [shape = 'u8[512]{0}', space=vmem, size = 0x400, scoped, tag = 'input window, operand 8, single buffered']
    #allocation17 [shape = 'u8[8192]{0}', space=vmem, size = 0x2000, scoped, tag = 'output window, operand 0']
    #allocation18 [shape = 'u8[8192]{0}', space=vmem, size = 0x2000, scoped, tag = 'output window, operand 1']
    #allocation19 [shape = 's32[2]{0}', space=sflag, size = 0x8, scoped, tag = 'scoped memory for tpu_custom_call.1']
    %16 = vsyncpa [#allocation3], 0
    %s17 = scalar_lea.sflag [#allocation3], 1
    %18 = vsyncpa %s17, 0
    %19 = vsyncpa [#allocation6], 0
    %s20 = scalar_lea.sflag [#allocation6], 1
    %21 = vsyncpa %s20, 0
    %22 = vsyncpa [#allocation9], 0
    %23 = vsyncpa [#allocation12], 0
    %24 = vsyncpa [#allocation15], 0
    %25 = vsyncpa [#allocation4], 0
    %s26 = scalar_lea.sflag [#allocation4], 1
    %27 = vsyncpa %s26, 0
    %28 = vsyncpa [#allocation19], 0
    %s29 = scalar_lea.sflag [#allocation19], 1
    %30 = vsyncpa %s29, 0
    loop: start=0, step=1, limit=4
    $region2: #{tpu_custom_call.1} parent=1 // loop_pre_header
      _
    $region3: #{tpu_custom_call.1} parent=1 // loop_header
      %s32 = sphi 0, %s36
      %p33 = scmp.ge.s32.totalorder %s32, 4
      %s39 = sphi 0, %s51
      %s40 = sphi 0, %s47
      %s41 = sphi 0, %s39
      %s42 = sphi 0, %s40
      %s43 = sphi 0, %s41
      %s44 = sphi 0, %s42
      %s56 = sphi 0, %s58
      %s59 = sphi 0, %s56
      %s60 = sphi 0, %s59
      %s76 = sphi 0, %s60
      %s82 = sphi 0, %s84
      %s85 = sphi 0, %s82
      %s86 = sphi 0, %s85
      %s102 = sphi 0, %s86
      %s106 = sphi 0, %s106
      %s108 = sphi 0, %s106
      %s109 = sphi 0, %s108
      %s123 = sphi 0, %s109
      %s127 = sphi 0, %s127
      %s129 = sphi 0, %s127
      %s130 = sphi 0, %s129
      %s144 = sphi 0, %s130
      %s148 = sphi 0, %s148
      %s150 = sphi 0, %s148
      %s151 = sphi 0, %s150
      %s165 = sphi 0, %s151
      %s169 = sphi 0, %s169
      %s171 = sphi 0, %s169
      %s172 = sphi 0, %s171
      %s186 = sphi 0, %s172
      %s190 = sphi 0, %s190
      %s192 = sphi 0, %s190
      %s193 = sphi 0, %s192
      %s207 = sphi 0, %s193
      %s211 = sphi 0, %s211
      %s213 = sphi 0, %s211
      %s214 = sphi 0, %s213
      %s228 = sphi 0, %s214
      %s232 = sphi 0, %s232
      %s234 = sphi 0, %s232
      %s235 = sphi 0, %s234
      %s249 = sphi 0, %s235
      %s257 = sphi 0, %s259
      %s260 = sphi 0, %s257
      %s261 = sphi 0, %s260
      %s277 = sphi 0, %s261
      %s285 = sphi 0, %s287
      %s288 = sphi 0, %s285
      %s289 = sphi 0, %s288
      %s305 = sphi 0, %s289
    $region4: #{tpu_custom_call.1} parent=1 // loop_header_branch
      %35 = sbr.rel (%p33) target = $region8
    $region5: #{tpu_custom_call.1} parent=1 // loop_body
      %s37 = ssub.s32 %s32, 1
      %s38 = ssub.s32 %s32, 2
      %s45 = sadd.s32 1, %s40
      %p46 = scmp.ge.s32.totalorder %s45, 1
      %s47 = scalar_select %p46, 0, %s45
      %s48 = sadd.s32 1, %s39
      %s49 = scalar_select %p46, %s48, %s39
      %p50 = scmp.ge.s32.totalorder %s49, 2
      %s51 = scalar_select %p50, 0, %s49
      %s52 = ssub.s32 %s39, %s51
      %s53 = ssub.s32 %s40, %s47
      %s54 = sor.u32 %s52, %s53
      %p55 = scmp.eq.s32.totalorder %s54, 0
      %s57 = sadd.s32 %s56, 1
      %s58 = scalar_select %p55, %s56, %s57
      %p61 = pneg %p55
      %p62 = scmp.eq.s32.totalorder %s32, 1
      %p63 = por %p61, %p62
      %p64 = scmp.ne.s32.totalorder %s56, %s59
      %p65 = scmp.eq.s32.totalorder %s32, 0
      %p66 = por %p64, %p65
      %p67 = scmp.ne.s32.totalorder %s56, %s59
      %p68 = scmp.eq.s32.totalorder %s37, 1
      %p69 = por %p67, %p68
      %p70 = scmp.ne.s32.totalorder %s59, %s60
      %p71 = scmp.eq.s32.totalorder %s37, 0
      %p72 = por %p70, %p71
      %p73 = scmp.ne.s32.totalorder %s59, %s60
      %p74 = scmp.eq.s32.totalorder %s38, 1
      %p75 = por %p73, %p74
      %p77 = scmp.ne.s32.totalorder %s60, %s76
      %p78 = scmp.eq.s32.totalorder %s38, 0
      %p79 = por %p77, %p78
      %s80 = ssub.s32 %s39, %s51
      %p81 = scmp.eq.s32.totalorder %s80, 0
      %s83 = sadd.s32 %s82, 1
      %s84 = scalar_select %p81, %s82, %s83
      %p87 = pneg %p81
      %p88 = scmp.eq.s32.totalorder %s32, 1
      %p89 = por %p87, %p88
      %p90 = scmp.ne.s32.totalorder %s82, %s85
      %p91 = scmp.eq.s32.totalorder %s32, 0
      %p92 = por %p90, %p91
      %p93 = scmp.ne.s32.totalorder %s82, %s85
      %p94 = scmp.eq.s32.totalorder %s37, 1
      %p95 = por %p93, %p94
      %p96 = scmp.ne.s32.totalorder %s85, %s86
      %p97 = scmp.eq.s32.totalorder %s37, 0
      %p98 = por %p96, %p97
      %p99 = scmp.ne.s32.totalorder %s85, %s86
      %p100 = scmp.eq.s32.totalorder %s38, 1
      %p101 = por %p99, %p100
      %p103 = scmp.ne.s32.totalorder %s86, %s102
      %p104 = scmp.eq.s32.totalorder %s38, 0
      %p105 = por %p103, %p104
      %s107 = sadd.s32 %s106, 1
      %p110 = scmp.eq.s32.totalorder %s32, 1
      %p111 = scmp.ne.s32.totalorder %s106, %s108
      %p112 = scmp.eq.s32.totalorder %s32, 0
      %p113 = por %p111, %p112
      %p114 = scmp.ne.s32.totalorder %s106, %s108
      %p115 = scmp.eq.s32.totalorder %s37, 1
      %p116 = por %p114, %p115
      %p117 = scmp.ne.s32.totalorder %s108, %s109
      %p118 = scmp.eq.s32.totalorder %s37, 0
      %p119 = por %p117, %p118
      %p120 = scmp.ne.s32.totalorder %s108, %s109
      %p121 = scmp.eq.s32.totalorder %s38, 1
      %p122 = por %p120, %p121
      %p124 = scmp.ne.s32.totalorder %s109, %s123
      %p125 = scmp.eq.s32.totalorder %s38, 0
      %p126 = por %p124, %p125
      %s128 = sadd.s32 %s127, 1
      %p131 = scmp.eq.s32.totalorder %s32, 1
      %p132 = scmp.ne.s32.totalorder %s127, %s129
      %p133 = scmp.eq.s32.totalorder %s32, 0
      %p134 = por %p132, %p133
      %p135 = scmp.ne.s32.totalorder %s127, %s129
      %p136 = scmp.eq.s32.totalorder %s37, 1
      %p137 = por %p135, %p136
      %p138 = scmp.ne.s32.totalorder %s129, %s130
      %p139 = scmp.eq.s32.totalorder %s37, 0
      %p140 = por %p138, %p139
      %p141 = scmp.ne.s32.totalorder %s129, %s130
      %p142 = scmp.eq.s32.totalorder %s38, 1
      %p143 = por %p141, %p142
      %p145 = scmp.ne.s32.totalorder %s130, %s144
      %p146 = scmp.eq.s32.totalorder %s38, 0
      %p147 = por %p145, %p146
      %s149 = sadd.s32 %s148, 1
      %p152 = scmp.eq.s32.totalorder %s32, 1
      %p153 = scmp.ne.s32.totalorder %s148, %s150
      %p154 = scmp.eq.s32.totalorder %s32, 0
      %p155 = por %p153, %p154
      %p156 = scmp.ne.s32.totalorder %s148, %s150
      %p157 = scmp.eq.s32.totalorder %s37, 1
      %p158 = por %p156, %p157
      %p159 = scmp.ne.s32.totalorder %s150, %s151
      %p160 = scmp.eq.s32.totalorder %s37, 0
      %p161 = por %p159, %p160
      %p162 = scmp.ne.s32.totalorder %s150, %s151
      %p163 = scmp.eq.s32.totalorder %s38, 1
      %p164 = por %p162, %p163
      %p166 = scmp.ne.s32.totalorder %s151, %s165
      %p167 = scmp.eq.s32.totalorder %s38, 0
      %p168 = por %p166, %p167
      %s170 = sadd.s32 %s169, 1
      %p173 = scmp.eq.s32.totalorder %s32, 1
      %p174 = scmp.ne.s32.totalorder %s169, %s171
      %p175 = scmp.eq.s32.totalorder %s32, 0
      %p176 = por %p174, %p175
      %p177 = scmp.ne.s32.totalorder %s169, %s171
      %p178 = scmp.eq.s32.totalorder %s37, 1
      %p179 = por %p177, %p178
      %p180 = scmp.ne.s32.totalorder %s171, %s172
      %p181 = scmp.eq.s32.totalorder %s37, 0
      %p182 = por %p180, %p181
      %p183 = scmp.ne.s32.totalorder %s171, %s172
      %p184 = scmp.eq.s32.totalorder %s38, 1
      %p185 = por %p183, %p184
      %p187 = scmp.ne.s32.totalorder %s172, %s186
      %p188 = scmp.eq.s32.totalorder %s38, 0
      %p189 = por %p187, %p188
      %s191 = sadd.s32 %s190, 1
      %p194 = scmp.eq.s32.totalorder %s32, 1
      %p195 = scmp.ne.s32.totalorder %s190, %s192
      %p196 = scmp.eq.s32.totalorder %s32, 0
      %p197 = por %p195, %p196
      %p198 = scmp.ne.s32.totalorder %s190, %s192
      %p199 = scmp.eq.s32.totalorder %s37, 1
      %p200 = por %p198, %p199
      %p201 = scmp.ne.s32.totalorder %s192, %s193
      %p202 = scmp.eq.s32.totalorder %s37, 0
      %p203 = por %p201, %p202
      %p204 = scmp.ne.s32.totalorder %s192, %s193
      %p205 = scmp.eq.s32.totalorder %s38, 1
      %p206 = por %p204, %p205
      %p208 = scmp.ne.s32.totalorder %s193, %s207
      %p209 = scmp.eq.s32.totalorder %s38, 0
      %p210 = por %p208, %p209
      %s212 = sadd.s32 %s211, 1
      %p215 = scmp.eq.s32.totalorder %s32, 1
      %p216 = scmp.ne.s32.totalorder %s211, %s213
      %p217 = scmp.eq.s32.totalorder %s32, 0
      %p218 = por %p216, %p217
      %p219 = scmp.ne.s32.totalorder %s211, %s213
      %p220 = scmp.eq.s32.totalorder %s37, 1
      %p221 = por %p219, %p220
      %p222 = scmp.ne.s32.totalorder %s213, %s214
      %p223 = scmp.eq.s32.totalorder %s37, 0
      %p224 = por %p222, %p223
      %p225 = scmp.ne.s32.totalorder %s213, %s214
      %p226 = scmp.eq.s32.totalorder %s38, 1
      %p227 = por %p225, %p226
      %p229 = scmp.ne.s32.totalorder %s214, %s228
      %p230 = scmp.eq.s32.totalorder %s38, 0
      %p231 = por %p229, %p230
      %s233 = sadd.s32 %s232, 1
      %p236 = scmp.eq.s32.totalorder %s32, 1
      %p237 = scmp.ne.s32.totalorder %s232, %s234
      %p238 = scmp.eq.s32.totalorder %s32, 0
      %p239 = por %p237, %p238
      %p240 = scmp.ne.s32.totalorder %s232, %s234
      %p241 = scmp.eq.s32.totalorder %s37, 1
      %p242 = por %p240, %p241
      %p243 = scmp.ne.s32.totalorder %s234, %s235
      %p244 = scmp.eq.s32.totalorder %s37, 0
      %p245 = por %p243, %p244
      %p246 = scmp.ne.s32.totalorder %s234, %s235
      %p247 = scmp.eq.s32.totalorder %s38, 1
      %p248 = por %p246, %p247
      %p250 = scmp.ne.s32.totalorder %s235, %s249
      %p251 = scmp.eq.s32.totalorder %s38, 0
      %p252 = por %p250, %p251
      %s253 = ssub.s32 %s39, %s51
      %s254 = ssub.s32 %s40, %s47
      %s255 = sor.u32 %s253, %s254
      %p256 = scmp.eq.s32.totalorder %s255, 0
      %s258 = sadd.s32 %s257, 1
      %s259 = scalar_select %p256, %s257, %s258
      %p262 = pneg %p256
      %p263 = scmp.eq.s32.totalorder %s32, 1
      %p264 = por %p262, %p263
      %p265 = scmp.ne.s32.totalorder %s257, %s260
      %p266 = scmp.eq.s32.totalorder %s32, 0
      %p267 = por %p265, %p266
      %p268 = scmp.ne.s32.totalorder %s257, %s260
      %p269 = scmp.eq.s32.totalorder %s37, 1
      %p270 = por %p268, %p269
      %p271 = scmp.ne.s32.totalorder %s260, %s261
      %p272 = scmp.eq.s32.totalorder %s37, 0
      %p273 = por %p271, %p272
      %p274 = scmp.ne.s32.totalorder %s260, %s261
      %p275 = scmp.eq.s32.totalorder %s38, 1
      %p276 = por %p274, %p275
      %p278 = scmp.ne.s32.totalorder %s261, %s277
      %p279 = scmp.eq.s32.totalorder %s38, 0
      %p280 = por %p278, %p279
      %s281 = ssub.s32 %s39, %s51
      %s282 = ssub.s32 %s40, %s47
      %s283 = sor.u32 %s281, %s282
      %p284 = scmp.eq.s32.totalorder %s283, 0
      %s286 = sadd.s32 %s285, 1
      %s287 = scalar_select %p284, %s285, %s286
      %p290 = pneg %p284
      %p291 = scmp.eq.s32.totalorder %s32, 1
      %p292 = por %p290, %p291
      %p293 = scmp.ne.s32.totalorder %s285, %s288
      %p294 = scmp.eq.s32.totalorder %s32, 0
      %p295 = por %p293, %p294
      %p296 = scmp.ne.s32.totalorder %s285, %s288
      %p297 = scmp.eq.s32.totalorder %s37, 1
      %p298 = por %p296, %p297
      %p299 = scmp.ne.s32.totalorder %s288, %s289
      %p300 = scmp.eq.s32.totalorder %s37, 0
      %p301 = por %p299, %p300
      %p302 = scmp.ne.s32.totalorder %s288, %s289
      %p303 = scmp.eq.s32.totalorder %s38, 1
      %p304 = por %p302, %p303
      %p306 = scmp.ne.s32.totalorder %s289, %s305
      %p307 = scmp.eq.s32.totalorder %s38, 0
      %p308 = por %p306, %p307
      %p309 = scmp.le.s32.totalorder 1, %s32
      %p310 = scmp.lt.s32.totalorder %s32, 3
      %p311 = pnand %p309, %p310
      %p312 = pneg %p311
      // Predicated region
      $region9: #{tpu_custom_call.1} parent=5 // pred_check
        _
      $region10: #{tpu_custom_call.1} parent=5 // pred_check_branch
        %314 = sbr.rel (%p311) target = $region12
      $region11: #{tpu_custom_call.1} parent=5 // pred_region
        %s315 = ssub.s32 %s32, 1
        // Predicated region
        $region13: #{tpu_custom_call.1} parent=11 // pred_check
          %p316 = pneg %p119
        $region14: #{tpu_custom_call.1} parent=11 // pred_check_branch
          %318 = sbr.rel (%p316) target = $region16
        $region15: #{tpu_custom_call.1} parent=11 // pred_region
          %s320 = ssub.s32 256, 256
          %321 = vsyncadd [#allocation6], %s320
          %s322 = sshll.u32 [#allocation7], 4
          %s323 = int_to_ptr.vmem [resolvable:$true] %s322
          %328 = dma.hbm_to_vmem [thread:$0]  %s2, 256, %s323, [#allocation6], 64, 64, 4
        $region16: #{tpu_custom_call.1} parent=11 // pred_fallthru
          _
        // Predicated region
        $region17: #{tpu_custom_call.1} parent=11 // pred_check
          %p329 = pneg %p140
        $region18: #{tpu_custom_call.1} parent=11 // pred_check_branch
          %331 = sbr.rel (%p329) target = $region20
        $region19: #{tpu_custom_call.1} parent=11 // pred_region
          %s333 = ssub.s32 16, 16
          %334 = vsyncadd [#allocation9], %s333
          %s336 = sshll.u32 [#allocation8], 4
          %s337 = int_to_ptr.vmem [resolvable:$true] %s336
          %339 = dma.hbm_to_vmem [thread:$0]  %s3, 16, %s337, [#allocation9]
        $region20: #{tpu_custom_call.1} parent=11 // pred_fallthru
          _
        // Predicated region
        $region21: #{tpu_custom_call.1} parent=11 // pred_check
          %p340 = pneg %p161
        $region22: #{tpu_custom_call.1} parent=11 // pred_check_branch
          %342 = sbr.rel (%p340) target = $region24
        $region23: #{tpu_custom_call.1} parent=11 // pred_region
          %s344 = ssub.s32 256, 256
          %345 = vsyncadd [#allocation9], %s344
          %s346 = sshll.u32 [#allocation10], 4
          %s347 = int_to_ptr.vmem [resolvable:$true] %s346
          %352 = dma.hbm_to_vmem [thread:$0]  %s4, 256, %s347, [#allocation9], 64, 64, 4
        $region24: #{tpu_custom_call.1} parent=11 // pred_fallthru
          _
        // Predicated region
        $region25: #{tpu_custom_call.1} parent=11 // pred_check
          %p353 = pneg %p182
        $region26: #{tpu_custom_call.1} parent=11 // pred_check_branch
          %355 = sbr.rel (%p353) target = $region28
        $region27: #{tpu_custom_call.1} parent=11 // pred_region
          %s357 = ssub.s32 16, 16
          %358 = vsyncadd [#allocation12], %s357
          %s360 = sshll.u32 [#allocation11], 4
          %s361 = int_to_ptr.vmem [resolvable:$true] %s360
          %363 = dma.hbm_to_vmem [thread:$0]  %s5, 16, %s361, [#allocation12]
        $region28: #{tpu_custom_call.1} parent=11 // pred_fallthru
          _
        // Predicated region
        $region29: #{tpu_custom_call.1} parent=11 // pred_check
          %p364 = pneg %p203
        $region30: #{tpu_custom_call.1} parent=11 // pred_check_branch
          %366 = sbr.rel (%p364) target = $region32
        $region31: #{tpu_custom_call.1} parent=11 // pred_region
          %s368 = ssub.s32 256, 256
          %369 = vsyncadd [#allocation12], %s368
          %s370 = sshll.u32 [#allocation13], 4
          %s371 = int_to_ptr.vmem [resolvable:$true] %s370
          %376 = dma.hbm_to_vmem [thread:$0]  %s6, 256, %s371, [#allocation12], 64, 64, 4
        $region32: #{tpu_custom_call.1} parent=11 // pred_fallthru
          _
        // Predicated region
        $region33: #{tpu_custom_call.1} parent=11 // pred_check
          %p377 = pneg %p224
        $region34: #{tpu_custom_call.1} parent=11 // pred_check_branch
          %379 = sbr.rel (%p377) target = $region36
        $region35: #{tpu_custom_call.1} parent=11 // pred_region
          %s381 = ssub.s32 16, 16
          %382 = vsyncadd [#allocation15], %s381
          %s384 = sshll.u32 [#allocation14], 4
          %s385 = int_to_ptr.vmem [resolvable:$true] %s384
          %387 = dma.hbm_to_vmem [thread:$0]  %s7, 16, %s385, [#allocation15]
        $region36: #{tpu_custom_call.1} parent=11 // pred_fallthru
          _
        // Predicated region
        $region37: #{tpu_custom_call.1} parent=11 // pred_check
          %p388 = pneg %p245
        $region38: #{tpu_custom_call.1} parent=11 // pred_check_branch
          %390 = sbr.rel (%p388) target = $region40
        $region39: #{tpu_custom_call.1} parent=11 // pred_region
          %s392 = ssub.s32 16, 16
          %393 = vsyncadd [#allocation15], %s392
          %s395 = sshll.u32 [#allocation16], 4
          %s396 = int_to_ptr.vmem [resolvable:$true] %s395
          %398 = dma.hbm_to_vmem [thread:$0]  %s8, 16, %s396, [#allocation15]
        $region40: #{tpu_custom_call.1} parent=11 // pred_fallthru
          _
      $region12: #{tpu_custom_call.1} parent=5 // pred_fallthru
        _
      %p399 = scmp.lt.s32.totalorder %s32, 2
      // Predicated region
      $region41: #{tpu_custom_call.1} parent=5 // pred_check
        %p400 = pneg %p399
      $region42: #{tpu_custom_call.1} parent=5 // pred_check_branch
        %402 = sbr.rel (%p400) target = $region44
      $region43: #{tpu_custom_call.1} parent=5 // pred_region
        // Predicated region
        $region45: #{tpu_custom_call.1} parent=43 // pred_check
          %p403 = pneg %p66
        $region46: #{tpu_custom_call.1} parent=43 // pred_check_branch
          %405 = sbr.rel (%p403) target = $region48
        $region47: #{tpu_custom_call.1} parent=43 // pred_region
          %s406 = sand.u32 %s56, 1
          %s407 = scalar_lea.sflag [#allocation3], %s406
          %s408 = sand.u32 %s56, 1
          %s409 = smul.addr %s408, 4
          %s410 = scalar_lea.vmem [#allocation2], %s409
          %s412 = ssub.s32 64, 64
          %413 = vsyncadd %s407, %s412
          %s414 = sadd.s32 %s40, %s39
          %s415 = smul.addr %s414, 64
          %s416 = scalar_lea.hbm %s0, %s415
          %s418 = sshll.u32 %s410, 4
          %s419 = int_to_ptr.vmem [resolvable:$true] %s418
          %421 = dma.hbm_to_vmem [thread:$0]  %s416, 64, %s419, %s407
        $region48: #{tpu_custom_call.1} parent=43 // pred_fallthru
          _
        // Predicated region
        $region49: #{tpu_custom_call.1} parent=43 // pred_check
          %p422 = pneg %p92
        $region50: #{tpu_custom_call.1} parent=43 // pred_check_branch
          %424 = sbr.rel (%p422) target = $region52
        $region51: #{tpu_custom_call.1} parent=43 // pred_region
          %s425 = sand.u32 %s32, 1
          %s426 = scalar_lea.sflag [#allocation6], %s425
          %s427 = sand.u32 %s82, 1
          %s428 = smul.addr %s427, 4
          %s429 = scalar_lea.vmem [#allocation5], %s428
          %s431 = ssub.s32 64, 64
          %432 = vsyncadd %s426, %s431
          %s433 = smul.addr %s39, 64
          %s434 = scalar_lea.hbm %s1, %s433
          %s436 = sshll.u32 %s429, 4
          %s437 = int_to_ptr.vmem [resolvable:$true] %s436
          %439 = dma.hbm_to_vmem [thread:$0]  %s434, 64, %s437, %s426
        $region52: #{tpu_custom_call.1} parent=43 // pred_fallthru
          _
      $region44: #{tpu_custom_call.1} parent=5 // pred_fallthru
        _
      %p440 = scmp.le.s32.totalorder 1, %s32
      %p441 = scmp.lt.s32.totalorder %s32, 3
      %p442 = pnand %p440, %p441
      %p443 = pneg %p442
      // Predicated region
      $region53: #{tpu_custom_call.1} parent=5 // pred_check
        _
      $region54: #{tpu_custom_call.1} parent=5 // pred_check_branch
        %445 = sbr.rel (%p442) target = $region56
      $region55: #{tpu_custom_call.1} parent=5 // pred_region
        %s446 = ssub.s32 %s32, 1
        %s447 = sand.u32 %s59, 1
        %s448 = scalar_lea.sflag [#allocation3], %s447
        %s449 = sand.u32 %s59, 1
        %s450 = smul.addr %s449, 4
        %s451 = scalar_lea.vmem [#allocation2], %s450
        // Predicated region
        $region57: #{tpu_custom_call.1} parent=55 // pred_check
          %p452 = pneg %p72
        $region58: #{tpu_custom_call.1} parent=55 // pred_check_branch
          %454 = sbr.rel (%p452) target = $region60
        $region59: #{tpu_custom_call.1} parent=55 // pred_region
          %455 = dma.done %s448, 64
        $region60: #{tpu_custom_call.1} parent=55 // pred_fallthru
          _
        %s456 = sand.u32 %s37, 1
        %s457 = scalar_lea.sflag [#allocation6], %s456
        %s458 = sand.u32 %s85, 1
        %s459 = smul.addr %s458, 4
        %s460 = scalar_lea.vmem [#allocation5], %s459
        // Predicated region
        $region61: #{tpu_custom_call.1} parent=55 // pred_check
          %p461 = pneg %p98
        $region62: #{tpu_custom_call.1} parent=55 // pred_check_branch
          %463 = sbr.rel (%p461) target = $region64
        $region63: #{tpu_custom_call.1} parent=55 // pred_region
          %464 = dma.done %s457, 64
        $region64: #{tpu_custom_call.1} parent=55 // pred_fallthru
          _
        // Predicated region
        $region65: #{tpu_custom_call.1} parent=55 // pred_check
          %p465 = pneg %p119
        $region66: #{tpu_custom_call.1} parent=55 // pred_check_branch
          %467 = sbr.rel (%p465) target = $region68
        $region67: #{tpu_custom_call.1} parent=55 // pred_region
          %468 = dma.done [#allocation6], 256
        $region68: #{tpu_custom_call.1} parent=55 // pred_fallthru
          _
        // Predicated region
        $region69: #{tpu_custom_call.1} parent=55 // pred_check
          %p469 = pneg %p140
        $region70: #{tpu_custom_call.1} parent=55 // pred_check_branch
          %471 = sbr.rel (%p469) target = $region72
        $region71: #{tpu_custom_call.1} parent=55 // pred_region
          %472 = dma.done [#allocation9], 16
        $region72: #{tpu_custom_call.1} parent=55 // pred_fallthru
          _
        // Predicated region
        $region73: #{tpu_custom_call.1} parent=55 // pred_check
          %p473 = pneg %p161
        $region74: #{tpu_custom_call.1} parent=55 // pred_check_branch
          %475 = sbr.rel (%p473) target = $region76
        $region75: #{tpu_custom_call.1} parent=55 // pred_region
          %476 = dma.done [#allocation9], 256
        $region76: #{tpu_custom_call.1} parent=55 // pred_fallthru
          _
        // Predicated region
        $region77: #{tpu_custom_call.1} parent=55 // pred_check
          %p477 = pneg %p182
        $region78: #{tpu_custom_call.1} parent=55 // pred_check_branch
          %479 = sbr.rel (%p477) target = $region80
        $region79: #{tpu_custom_call.1} parent=55 // pred_region
          %480 = dma.done [#allocation12], 16
        $region80: #{tpu_custom_call.1} parent=55 // pred_fallthru
          _
        // Predicated region
        $region81: #{tpu_custom_call.1} parent=55 // pred_check
          %p481 = pneg %p203
        $region82: #{tpu_custom_call.1} parent=55 // pred_check_branch
          %483 = sbr.rel (%p481) target = $region84
        $region83: #{tpu_custom_call.1} parent=55 // pred_region
          %484 = dma.done [#allocation12], 256
        $region84: #{tpu_custom_call.1} parent=55 // pred_fallthru
          _
        // Predicated region
        $region85: #{tpu_custom_call.1} parent=55 // pred_check
          %p485 = pneg %p224
        $region86: #{tpu_custom_call.1} parent=55 // pred_check_branch
          %487 = sbr.rel (%p485) target = $region88
        $region87: #{tpu_custom_call.1} parent=55 // pred_region
          %488 = dma.done [#allocation15], 16
        $region88: #{tpu_custom_call.1} parent=55 // pred_fallthru
          _
        // Predicated region
        $region89: #{tpu_custom_call.1} parent=55 // pred_check
          %p489 = pneg %p245
        $region90: #{tpu_custom_call.1} parent=55 // pred_check_branch
          %491 = sbr.rel (%p489) target = $region92
        $region91: #{tpu_custom_call.1} parent=55 // pred_region
          %492 = dma.done [#allocation15], 16
        $region92: #{tpu_custom_call.1} parent=55 // pred_fallthru
          _
        %s493 = sand.u32 %s59, 1
        %s494 = scalar_lea.sflag [#allocation3], %s493
        %s495 = sand.u32 %s59, 1
        %s496 = smul.addr %s495, 4
        %s497 = scalar_lea.vmem [#allocation2], %s496
        %p498 = pneg %p72
        %p499 = pneg %p69
        %s500 = sand.u32 %s37, 1
        %s501 = scalar_lea.sflag [#allocation6], %s500
        %s502 = sand.u32 %s85, 1
        %s503 = smul.addr %s502, 4
        %s504 = scalar_lea.vmem [#allocation5], %s503
        %p505 = pneg %p98
        %p506 = pneg %p95
        %p507 = pneg %p119
        %p508 = pneg %p116
        %p509 = pneg %p140
        %p510 = pneg %p137
        %p511 = pneg %p161
        %p512 = pneg %p158
        %p513 = pneg %p182
        %p514 = pneg %p179
        %p515 = pneg %p203
        %p516 = pneg %p200
        %p517 = pneg %p224
        %p518 = pneg %p221
        %p519 = pneg %p245
        %p520 = pneg %p242
        %p521 = pneg %p273
        %p522 = pneg %p270
        %s523 = sand.u32 %s260, 1
        %s524 = scalar_lea.sflag [#allocation4], %s523
        %s525 = sand.u32 %s260, 1
        %s526 = smul.addr %s525, 8
        %s527 = scalar_lea.vmem [#allocation17], %s526
        %p528 = pneg %p301
        %p529 = pneg %p298
        %s530 = sand.u32 %s288, 1
        %s531 = scalar_lea.sflag [#allocation19], %s530
        %s532 = sand.u32 %s288, 1
        %s533 = smul.addr %s532, 8
        %s534 = scalar_lea.vmem [#allocation18], %s533
        %v536 = vld [vmem:[%s451] sm:$0xf]
        %v537 = vld [vmem:[%s460] sm:$0xf]
        %v538 = vld [vmem:[#allocation7] sm:$0xf]
        %v539 = vld [vmem:[#allocation7 + $0x4] sm:$0xf]
        %v540 = vld [vmem:[#allocation7 + $0x8] sm:$0xf]
        %v541 = vld [vmem:[#allocation7 + $0xc] sm:$0xf]
        %v542 = vld [vmem:[#allocation8] sm:$0x1]
        %v544 = vlaneseq
        %v545 = vshrl.u32 %v544, 7
        %v546 = vsub.s32 0, %v545
        %v547 = vrot.slane %v542, %v546
        %v553 = vunpack.c.l.b16 %v538
        %v554 = vunpack.c.l.b16 %v539
        %v555 = vunpack.c.l.b16 %v540
        %v556 = vunpack.c.l.b16 %v541
        %v557 = vpack.c.b16 %v554, %v553
        %v558 = vpack.c.b16 %v556, %v555
        %vm561 = vcmask 261120
        %v563 = vsel %vm561, %v536, 0
        %565 = vmatprep.subr.bf16.mxu0 0
        %566 = vmatpush1.bf16.msra.mxu0 %v557
        %567 = vmatprep.subr.bf16.mxu0 0
        %568 = vmatpush1.bf16.msra.mxu0 %v558
        %569 = vmatprep.subr.bf16.mxu0 0
        %570 = vmatpush1.bf16.msra.mxu0 0
        %571 = vmatprep.subr.bf16.mxu0 0
        %572 = vmatpush1.bf16.msra.mxu0 0
        %573 = vmatprep.subr.bf16.mxu0 0
        %574 = vmatpush1.bf16.msra.mxu0 0
        %575 = vmatprep.subr.bf16.mxu0 0
        %576 = vmatpush1.bf16.msra.mxu0 0
        %577 = vmatprep.subr.bf16.mxu0 0
        %578 = vmatpush1.bf16.msra.mxu0 0
        %579 = vmatprep.subr.bf16.mxu0 0
        %580 = vmatpush1.bf16.msra.mxu0 0
        %581 = vmatprep.subr.bf16.mxu0 0
        %582 = vmatpush1.bf16.msra.mxu0 0
        %583 = vmatprep.subr.bf16.mxu0 0
        %584 = vmatpush1.bf16.msra.mxu0 0
        %585 = vmatprep.subr.bf16.mxu0 0
        %586 = vmatpush1.bf16.msra.mxu0 0
        %587 = vmatprep.subr.bf16.mxu0 0
        %588 = vmatpush1.bf16.msra.mxu0 0
        %589 = vmatprep.subr.bf16.mxu0 0
        %590 = vmatpush1.bf16.msra.mxu0 0
        %591 = vmatprep.subr.bf16.mxu0 0
        %592 = vmatpush1.bf16.msra.mxu0 0
        %593 = vmatprep.subr.bf16.mxu0 0
        %594 = vmatpush1.bf16.msra.mxu0 0
        %595 = vmatprep.subr.bf16.mxu0 0
        %596 = vmatpush1.bf16.msra.mxu0 0
        %597 = vmatprep.mubr.bf16.mxu0 0
        %598 = vmatmul.mubr.bf16.gmra.mrb[0].mxu0 %v563
        %v599 = vpop.f32.mrb[0].mxu0
        %v600 = vadd.f32 %v547, %v599
        %v601 = vpop.f32.mrb[0].mxu0
        %v602 = vpop.f32.mrb[0].mxu0
        %v603 = vpop.f32.mrb[0].mxu0
        %604 = vdwg.mxu0
        %v605 = vld [vmem:[#allocation10] sm:$0xf]
        %v606 = vld [vmem:[#allocation10 + $0x4] sm:$0xf]
        %v607 = vld [vmem:[#allocation10 + $0x8] sm:$0xf]
        %v608 = vld [vmem:[#allocation10 + $0xc] sm:$0xf]
        %v609 = vld [vmem:[#allocation11] sm:$0x1]
        %v611 = vlaneseq
        %v612 = vshrl.u32 %v611, 7
        %v613 = vsub.s32 0, %v612
        %v614 = vrot.slane %v609, %v613
        %v620 = vunpack.c.l.b16 %v605
        %v621 = vunpack.c.l.b16 %v606
        %v622 = vunpack.c.l.b16 %v607
        %v623 = vunpack.c.l.b16 %v608
        %v624 = vpack.c.b16 %v621, %v620
        %v625 = vpack.c.b16 %v623, %v622
        %v629 = vsel %vm561, %v537, 0
        %631 = vmatprep.subr.bf16.mxu0 0
        %632 = vmatpush1.bf16.msra.mxu0 %v624
        %633 = vmatprep.subr.bf16.mxu0 0
        %634 = vmatpush1.bf16.msra.mxu0 %v625
        %635 = vmatprep.subr.bf16.mxu0 0
        %636 = vmatpush1.bf16.msra.mxu0 0
        %637 = vmatprep.subr.bf16.mxu0 0
        %638 = vmatpush1.bf16.msra.mxu0 0
        %639 = vmatprep.subr.bf16.mxu0 0
        %640 = vmatpush1.bf16.msra.mxu0 0
        %641 = vmatprep.subr.bf16.mxu0 0
        %642 = vmatpush1.bf16.msra.mxu0 0
        %643 = vmatprep.subr.bf16.mxu0 0
        %644 = vmatpush1.bf16.msra.mxu0 0
        %645 = vmatprep.subr.bf16.mxu0 0
        %646 = vmatpush1.bf16.msra.mxu0 0
        %647 = vmatprep.subr.bf16.mxu0 0
        %648 = vmatpush1.bf16.msra.mxu0 0
        %649 = vmatprep.subr.bf16.mxu0 0
        %650 = vmatpush1.bf16.msra.mxu0 0
        %651 = vmatprep.subr.bf16.mxu0 0
        %652 = vmatpush1.bf16.msra.mxu0 0
        %653 = vmatprep.subr.bf16.mxu0 0
        %654 = vmatpush1.bf16.msra.mxu0 0
        %655 = vmatprep.subr.bf16.mxu0 0
        %656 = vmatpush1.bf16.msra.mxu0 0
        %657 = vmatprep.subr.bf16.mxu0 0
        %658 = vmatpush1.bf16.msra.mxu0 0
        %659 = vmatprep.subr.bf16.mxu0 0
        %660 = vmatpush1.bf16.msra.mxu0 0
        %661 = vmatprep.subr.bf16.mxu0 0
        %662 = vmatpush1.bf16.msra.mxu0 0
        %663 = vmatprep.mubr.bf16.mxu0 0
        %664 = vmatmul.mubr.bf16.gmra.mrb[0].mxu0 %v629
        %v665 = vpop.f32.mrb[0].mxu0
        %v666 = vadd.f32 %v614, %v665
        %v667 = vpop.f32.mrb[0].mxu0
        %v668 = vpop.f32.mrb[0].mxu0
        %v669 = vpop.f32.mrb[0].mxu0
        %670 = vdwg.mxu0
        %v671 = vld [vmem:[#allocation13] sm:$0xf]
        %v672 = vld [vmem:[#allocation13 + $0x4] sm:$0xf]
        %v673 = vld [vmem:[#allocation13 + $0x8] sm:$0xf]
        %v674 = vld [vmem:[#allocation13 + $0xc] sm:$0xf]
        %v675 = vld [vmem:[#allocation14] sm:$0x1]
        %v677 = vlaneseq
        %v678 = vshrl.u32 %v677, 7
        %v679 = vsub.s32 0, %v678
        %v680 = vrot.slane %v675, %v679
        %v686 = vunpack.c.l.b16 %v671
        %v687 = vunpack.c.l.b16 %v672
        %v688 = vunpack.c.l.b16 %v673
        %v689 = vunpack.c.l.b16 %v674
        %v690 = vpack.c.b16 %v687, %v686
        %v691 = vpack.c.b16 %v689, %v688
        %694 = vmatprep.subr.bf16.mxu0 0
        %695 = vmatpush1.bf16.msra.mxu0 %v690
        %696 = vmatprep.subr.bf16.mxu0 0
        %697 = vmatpush1.bf16.msra.mxu0 %v691
        %698 = vmatprep.subr.bf16.mxu0 0
        %699 = vmatpush1.bf16.msra.mxu0 0
        %700 = vmatprep.subr.bf16.mxu0 0
        %701 = vmatpush1.bf16.msra.mxu0 0
        %702 = vmatprep.subr.bf16.mxu0 0
        %703 = vmatpush1.bf16.msra.mxu0 0
        %704 = vmatprep.subr.bf16.mxu0 0
        %705 = vmatpush1.bf16.msra.mxu0 0
        %706 = vmatprep.subr.bf16.mxu0 0
        %707 = vmatpush1.bf16.msra.mxu0 0
        %708 = vmatprep.subr.bf16.mxu0 0
        %709 = vmatpush1.bf16.msra.mxu0 0
        %710 = vmatprep.subr.bf16.mxu0 0
        %711 = vmatpush1.bf16.msra.mxu0 0
        %712 = vmatprep.subr.bf16.mxu0 0
        %713 = vmatpush1.bf16.msra.mxu0 0
        %714 = vmatprep.subr.bf16.mxu0 0
        %715 = vmatpush1.bf16.msra.mxu0 0
        %716 = vmatprep.subr.bf16.mxu0 0
        %717 = vmatpush1.bf16.msra.mxu0 0
        %718 = vmatprep.subr.bf16.mxu0 0
        %719 = vmatpush1.bf16.msra.mxu0 0
        %720 = vmatprep.subr.bf16.mxu0 0
        %721 = vmatpush1.bf16.msra.mxu0 0
        %722 = vmatprep.subr.bf16.mxu0 0
        %723 = vmatpush1.bf16.msra.mxu0 0
        %724 = vmatprep.subr.bf16.mxu0 0
        %725 = vmatpush1.bf16.msra.mxu0 0
        %726 = vmatprep.mubr.bf16.mxu0 0
        %727 = vmatmul.mubr.bf16.gmra.mrb[0].mxu0 %v629
        %v728 = vpop.f32.mrb[0].mxu0
        %v729 = vadd.f32 %v680, %v728
        %v730 = vpop.f32.mrb[0].mxu0
        %v731 = vpop.f32.mrb[0].mxu0
        %v732 = vpop.f32.mrb[0].mxu0
        %733 = vdwg.mxu0
        %v734 = vpack.c.bf16 %v600, %v600
        %v735 = vpack.c.bf16 %v666, %v666
        %v737 = vsel %vm561, %v734, 0
        %v740 = vsel %vm561, %v735, 0
        %742 = vmatprep.subr.bf16.mxu0 0
        %743 = vmatpush1.bf16.xpose.msra.mxu0 %v740
        %744 = vmatprep.subr.bf16.mxu0 0
        %745 = vmatpush1.bf16.xpose.msra.mxu0 0
        %746 = vmatprep.subr.bf16.mxu0 0
        %747 = vmatpush1.bf16.xpose.msra.mxu0 0
        %748 = vmatprep.subr.bf16.mxu0 0
        %749 = vmatpush1.bf16.xpose.msra.mxu0 0
        %750 = vmatprep.subr.bf16.mxu0 0
        %751 = vmatpush1.bf16.xpose.msra.mxu0 0
        %752 = vmatprep.subr.bf16.mxu0 0
        %753 = vmatpush1.bf16.xpose.msra.mxu0 0
        %754 = vmatprep.subr.bf16.mxu0 0
        %755 = vmatpush1.bf16.xpose.msra.mxu0 0
        %756 = vmatprep.subr.bf16.mxu0 0
        %757 = vmatpush1.bf16.xpose.msra.mxu0 0
        %758 = vmatprep.subr.bf16.mxu0 0
        %759 = vmatpush1.bf16.xpose.msra.mxu0 0
        %760 = vmatprep.subr.bf16.mxu0 0
        %761 = vmatpush1.bf16.xpose.msra.mxu0 0
        %762 = vmatprep.subr.bf16.mxu0 0
        %763 = vmatpush1.bf16.xpose.msra.mxu0 0
        %764 = vmatprep.subr.bf16.mxu0 0
        %765 = vmatpush1.bf16.xpose.msra.mxu0 0
        %766 = vmatprep.subr.bf16.mxu0 0
        %767 = vmatpush1.bf16.xpose.msra.mxu0 0
        %768 = vmatprep.subr.bf16.mxu0 0
        %769 = vmatpush1.bf16.xpose.msra.mxu0 0
        %770 = vmatprep.subr.bf16.mxu0 0
        %771 = vmatpush1.bf16.xpose.msra.mxu0 0
        %772 = vmatprep.subr.bf16.mxu0 0
        %773 = vmatpush1.bf16.xpose.msra.mxu0 0
        %774 = vmatprep.mubr.bf16.mxu0 0
        %775 = vmatmul.mubr.bf16.gmra.mrb[0].mxu0 %v737
        %v776 = vpop.f32.mrb[0].mxu0
        %v777 = vadd.f32 0.0, %v776
        %v778 = vpop.f32.mrb[0].mxu0
        %v779 = vpop.f32.mrb[0].mxu0
        %v780 = vpop.f32.mrb[0].mxu0
        %781 = vdwg.mxu0
        %vm782 = vcmask 64512
        %v783 = vsel %vm782, %v777, -inf
        %784 = vmax.xlane.f32.xlu0 %v783
        %v785 = vpop.xlane.xlu0 %784
        %v786 = vsub.f32 %v777, %v785
        %v787 = vmul.f32 %v786, 1.442695
        %v788 = vpow.pop %v787
        %v789 = vsel %vm782, %v788, 0.0
        %790 = vadd.xlane.f32.xlu0 %v789
        %v791 = vpop.xlane.xlu0 %790
        %v792 = vrcp.pop %v791
        %v793 = vmul.f32 %v788, %v792
        %794 = vst.msk [vmem:[%s527] sm:$0xff] %vm782, %v793
        %v795 = vpack.c.bf16 %v793, %v793
        %v796 = vpack.c.bf16 %v729, %v729
        %v797 = vld [vmem:[#allocation16] sm:$0x1]
        %v799 = vlaneseq
        %v800 = vshrl.u32 %v799, 7
        %v801 = vsub.s32 0, %v800
        %v802 = vrot.slane %v797, %v801
        %v805 = vsel %vm782, %v795, 0
        %vm807 = vcmask 1043456
        %v809 = vsel %vm807, %v796, 0
        %811 = vmatprep.subr.bf16.mxu0 0
        %812 = vmatpush1.bf16.msra.mxu0 %v809
        %813 = vmatprep.subr.bf16.mxu0 0
        %814 = vmatpush1.bf16.msra.mxu0 0
        %815 = vmatprep.subr.bf16.mxu0 0
        %816 = vmatpush1.bf16.msra.mxu0 0
        %817 = vmatprep.subr.bf16.mxu0 0
        %818 = vmatpush1.bf16.msra.mxu0 0
        %819 = vmatprep.subr.bf16.mxu0 0
        %820 = vmatpush1.bf16.msra.mxu0 0
        %821 = vmatprep.subr.bf16.mxu0 0
        %822 = vmatpush1.bf16.msra.mxu0 0
        %823 = vmatprep.subr.bf16.mxu0 0
        %824 = vmatpush1.bf16.msra.mxu0 0
        %825 = vmatprep.subr.bf16.mxu0 0
        %826 = vmatpush1.bf16.msra.mxu0 0
        %827 = vmatprep.subr.bf16.mxu0 0
        %828 = vmatpush1.bf16.msra.mxu0 0
        %829 = vmatprep.subr.bf16.mxu0 0
        %830 = vmatpush1.bf16.msra.mxu0 0
        %831 = vmatprep.subr.bf16.mxu0 0
        %832 = vmatpush1.bf16.msra.mxu0 0
        %833 = vmatprep.subr.bf16.mxu0 0
        %834 = vmatpush1.bf16.msra.mxu0 0
        %835 = vmatprep.subr.bf16.mxu0 0
        %836 = vmatpush1.bf16.msra.mxu0 0
        %837 = vmatprep.subr.bf16.mxu0 0
        %838 = vmatpush1.bf16.msra.mxu0 0
        %839 = vmatprep.subr.bf16.mxu0 0
        %840 = vmatpush1.bf16.msra.mxu0 0
        %841 = vmatprep.subr.bf16.mxu0 0
        %842 = vmatpush1.bf16.msra.mxu0 0
        %843 = vmatprep.mubr.bf16.mxu0 0
        %844 = vmatmul.mubr.bf16.gmra.mrb[0].mxu0 %v805
        %v845 = vpop.f32.mrb[0].mxu0
        %v846 = vadd.f32 %v802, %v845
        %v847 = vpop.f32.mrb[0].mxu0
        %v848 = vpop.f32.mrb[0].mxu0
        %v849 = vpop.f32.mrb[0].mxu0
        %850 = vdwg.mxu0
        %851 = vst [vmem:[%s534] sm:$0xff] %v846
        %s852 = sand.u32 %s260, 1
        %s853 = scalar_lea.sflag [#allocation4], %s852
        %s854 = sand.u32 %s260, 1
        %s855 = smul.addr %s854, 8
        %s856 = scalar_lea.vmem [#allocation17], %s855
        %s857 = sand.u32 %s288, 1
        %s858 = scalar_lea.sflag [#allocation19], %s857
        %s859 = sand.u32 %s288, 1
        %s860 = smul.addr %s859, 8
        %s861 = scalar_lea.vmem [#allocation18], %s860
        // Predicated region
        $region93: #{tpu_custom_call.1} parent=55 // pred_check
          %p862 = pneg %p270
        $region94: #{tpu_custom_call.1} parent=55 // pred_check_branch
          %864 = sbr.rel (%p862) target = $region96
        $region95: #{tpu_custom_call.1} parent=55 // pred_region
          %s866 = ssub.s32 128, 128
          %867 = vsyncadd %s853, %s866
          %s868 = sadd.s32 %s42, %s41
          %s869 = smul.addr %s868, 128
          %s870 = scalar_lea.hbm %s9, %s869
          %s872 = sshll.u32 %s856, 4
          %s873 = int_to_ptr.vmem [resolvable:$true] %s872
          %875 = dma.vmem_to_hbm [thread:$0]  %s873, 128, %s870, %s853
        $region96: #{tpu_custom_call.1} parent=55 // pred_fallthru
          _
        // Predicated region
        $region97: #{tpu_custom_call.1} parent=55 // pred_check
          %p876 = pneg %p298
        $region98: #{tpu_custom_call.1} parent=55 // pred_check_branch
          %878 = sbr.rel (%p876) target = $region100
        $region99: #{tpu_custom_call.1} parent=55 // pred_region
          %s880 = ssub.s32 128, 128
          %881 = vsyncadd %s858, %s880
          %s882 = sadd.s32 %s42, %s41
          %s883 = smul.addr %s882, 128
          %s884 = scalar_lea.hbm %s10, %s883
          %s886 = sshll.u32 %s861, 4
          %s887 = int_to_ptr.vmem [resolvable:$true] %s886
          %889 = dma.vmem_to_hbm [thread:$0]  %s887, 128, %s884, %s858
        $region100: #{tpu_custom_call.1} parent=55 // pred_fallthru
          _
      $region56: #{tpu_custom_call.1} parent=5 // pred_fallthru
        _
      %p890 = scmp.le.s32.totalorder 2, %s32
      // Predicated region
      $region101: #{tpu_custom_call.1} parent=5 // pred_check
        %p891 = pneg %p890
      $region102: #{tpu_custom_call.1} parent=5 // pred_check_branch
        %893 = sbr.rel (%p891) target = $region104
      $region103: #{tpu_custom_call.1} parent=5 // pred_region
        %s894 = ssub.s32 %s32, 2
        // Predicated region
        $region105: #{tpu_custom_call.1} parent=103 // pred_check
          %p895 = pneg %p276
        $region106: #{tpu_custom_call.1} parent=103 // pred_check_branch
          %897 = sbr.rel (%p895) target = $region108
        $region107: #{tpu_custom_call.1} parent=103 // pred_region
          %s898 = sand.u32 %s261, 1
          %s899 = scalar_lea.sflag [#allocation4], %s898
          %s900 = sand.u32 %s261, 1
          %s901 = smul.addr %s900, 8
          %s902 = scalar_lea.vmem [#allocation17], %s901
          %903 = dma.done %s899, 128
        $region108: #{tpu_custom_call.1} parent=103 // pred_fallthru
          _
        // Predicated region
        $region109: #{tpu_custom_call.1} parent=103 // pred_check
          %p904 = pneg %p304
        $region110: #{tpu_custom_call.1} parent=103 // pred_check_branch
          %906 = sbr.rel (%p904) target = $region112
        $region111: #{tpu_custom_call.1} parent=103 // pred_region
          %s907 = sand.u32 %s289, 1
          %s908 = scalar_lea.sflag [#allocation19], %s907
          %s909 = sand.u32 %s289, 1
          %s910 = smul.addr %s909, 8
          %s911 = scalar_lea.vmem [#allocation18], %s910
          %912 = dma.done %s908, 128
        $region112: #{tpu_custom_call.1} parent=103 // pred_fallthru
          _
      $region104: #{tpu_custom_call.1} parent=5 // pred_fallthru
        _
    $region6: #{tpu_custom_call.1} parent=1 // loop_footer
      %s36 = sadd.s32 1, %s32
    $region7: #{tpu_custom_call.1} parent=1 // loop_footer_branch
      %31 = sbr.rel target = $region3
    $region8: #{tpu_custom_call.1} parent=1 // loop_exit
      _
    %913 = vsyncpa [#allocation3], 1
    %s914 = scalar_lea.sflag [#allocation3], 1
    %915 = vsyncpa %s914, 1
    %916 = vsyncpa [#allocation6], 1
    %s917 = scalar_lea.sflag [#allocation6], 1
    %918 = vsyncpa %s917, 1
    %919 = vsyncpa [#allocation9], 1
    %920 = vsyncpa [#allocation12], 1
    %921 = vsyncpa [#allocation15], 1
    %922 = vsyncpa [#allocation4], 1
    %s923 = scalar_lea.sflag [#allocation4], 1
    %924 = vsyncpa %s923, 1
    %925 = vsyncpa [#allocation19], 1
    %s926 = scalar_lea.sflag [#allocation19], 1
    %927 = vsyncpa %s926, 1

</llo_original>
